<compile_context>
chip_gen: v7x
topology: tpu7x:2x2x1
jax: 0.10.0
libtpu: 0.0.40
codegen_flags: <defaults>
</compile_context>

<pallas_src>
import functools

import jax
import jax.numpy as jnp
from jax.experimental import pallas as pl
from jax.experimental.pallas import tpu as pltpu

LN_EPS = 1e-5


def _round_up(x, m):
    return ((x + m - 1) // m) * m


def _cdiv(a, b):
    return -(-a // b)


def _merge_kernel(e_ref, o_ref, w_ref, prm_ref, out_ref, *, th, wo_p, c_out, masked):
    """Fused 3x3/stride-2 conv (as 6 phase matmuls) + bias + LayerNorm.

    e_ref   : (th+1, wo_p+1, 2C)  bf16 even-row phase band (with +1 halo row)
    o_ref   : (th,   wo_p+1, 2C)  bf16 odd-row phase band
    w_ref   : (6, 2C, Cp)         bf16 per-shift weight matrices
    prm_ref : (8, Cp)             f32 row0=bias, row1=gamma, row2=beta, row3=mask
    out_ref : (th*wo_p, Cp)       output tile (true channels in [:, :c_out])
    """
    k2 = e_ref.shape[-1]
    rows = th * wo_p

    def tap(lhs, idx):
        # MXU: bf16 operands, f32 accumulation.
        return jnp.dot(lhs.reshape(rows, k2), w_ref[idx],
                       preferred_element_type=jnp.float32)

    # Six stride-1 slices of the two phase bands cover all nine conv taps
    # (the odd-column halves of the column-shifted reads hit zero weight rows).
    y = tap(e_ref[0:th, 0:wo_p, :], 0)           # taps (0,0), (0,1)
    y += tap(o_ref[0:th, 0:wo_p, :], 1)          # taps (1,0), (1,1)
    y += tap(e_ref[1:th + 1, 0:wo_p, :], 2)      # taps (2,0), (2,1)
    y += tap(e_ref[0:th, 1:wo_p + 1, :], 3)      # tap  (0,2)
    y += tap(o_ref[0:th, 1:wo_p + 1, :], 4)      # tap  (1,2)
    y += tap(e_ref[1:th + 1, 1:wo_p + 1, :], 5)  # tap  (2,2)

    prm = prm_ref[...]
    y = y + prm[0:1, :]                          # conv bias (padded cols stay 0)

    inv_c = 1.0 / c_out
    # Padded output channels of y are exactly zero (zero weight cols + zero
    # bias), so the plain sum already equals the sum over the true channels.
    mean = jnp.sum(y, axis=-1, keepdims=True) * inv_c
    centered = y - mean
    if masked:
        centered = centered * prm[3:4, :]        # zero padded cols before var
    var = jnp.sum(centered * centered, axis=-1, keepdims=True) * inv_c
    yn = centered * jax.lax.rsqrt(var + LN_EPS)
    out_ref[...] = (yn * prm[1:2, :] + prm[2:3, :]).astype(out_ref.dtype)


def merge_block(x, conv_w, conv_b, ln_g, ln_b, *,
                compute_dtype=jnp.bfloat16,
                out_dtype=None):
    """x: (B, H*W, C_in); conv_w: (C_out, C_in, 3, 3) -> (B, Ho*Wo, C_out)."""
    B, N, C_in = x.shape
    H = W = int(round(N ** 0.5))
    assert H * W == N, "Merge_Block assumes a square H == W spatial layout"
    # TODO(synk): non-square layouts are unsupported, same as the PyTorch module.
    C_out = conv_w.shape[0]
    Ho, Wo = (H + 1) // 2, (W + 1) // 2
    if out_dtype is None:
        out_dtype = x.dtype

    Wo_p = _round_up(Wo, 8)           # sublane-aligned output width
    Wp1 = Wo_p + 1
    K2 = 2 * C_in                     # packed (even-col, odd-col) channels
    Cp = _round_up(C_out, 128)        # lane-dense output channels

    in_sz = jnp.dtype(compute_dtype).itemsize
    out_sz = jnp.dtype(out_dtype).itemsize

    # ---- VMEM budget / row-band size -------------------------------------
    try:
        vmem_cap = int(pltpu.get_tpu_info().vmem_capacity_bytes)
    except Exception:
        vmem_cap = 64 * 1024 * 1024   # conservative (v7x-sized) fallback
    vmem_limit = min(int(vmem_cap * 0.7), 80 * 1024 * 1024)
    budget = vmem_limit - 8 * 1024 * 1024

    def footprint(th):
        e_blk = (th + 1) * Wp1 * K2 * in_sz
        o_blk = th * Wp1 * K2 * in_sz
        out_blk = th * Wo_p * Cp * out_sz
        w_blk = 6 * K2 * Cp * in_sz
        prm_blk = 8 * Cp * 4
        # All BlockSpec operands (incl. the constant-index weight/param blocks)
        # are double-buffered by the pipeline; add the f32 accumulator and one
        # materialized LHS slice for the in-kernel matmuls.
        return (2 * (e_blk + o_blk + out_blk + w_blk + prm_blk)
                + th * Wo_p * Cp * 4 + th * Wo_p * K2 * in_sz)

    Th = max(1, Ho)
    while Th > 1 and footprint(Th) > budget:
        Th = _cdiv(Th, 2)
    # Prefer >= 4 grid steps (pipeline overlap; both v7x TensorCores busy via
    # the "parallel" axis) as long as tiles keep >= 32 output rows.
    while B * _cdiv(Ho, Th) < 4 and Th > 1 and _cdiv(Th, 2) * Wo_p >= 32:
        Th = _cdiv(Th, 2)
    nb = _cdiv(Ho, Th)
    Ho_pad = nb * Th

    # ---- Phase-image construction (single pass over x, no im2col) ---------
    # Padded conv image xp[r, c] = x[r-1, c-1] (zero outside).  Packed phases:
    #   pe[b, i, j] = [xp[2i,   2j], xp[2i,   2j+1]]   i in [0, Ho_pad]
    #   po[b, i, j] = [xp[2i+1, 2j], xp[2i+1, 2j+1]]   i in [0, Ho_pad)
    x_img = x.reshape(B, H, W, C_in).astype(compute_dtype)
    He, We = 2 * Ho, 2 * Wo
    if (He, We) != (H, W):            # odd H / W -> pad to even extents
        x_img = jnp.pad(x_img, ((0, 0), (0, He - H), (0, We - W), (0, 0)))
    r = x_img.reshape(B, Ho, 2, Wo, 2, C_in)
    x_ee, x_eo = r[:, :, 0, :, 0], r[:, :, 0, :, 1]
    x_oe, x_oo = r[:, :, 1, :, 0], r[:, :, 1, :, 1]
    dh, dw = Ho_pad - Ho, Wo_p - Wo
    pe = jnp.concatenate([
        jnp.pad(x_oo, ((0, 0), (1, dh), (1, dw), (0, 0))),
        jnp.pad(x_oe, ((0, 0), (1, dh), (0, dw + 1), (0, 0))),
    ], axis=-1)                                   # (B, Ho_pad+1, Wp1, 2C)
    po = jnp.concatenate([
        jnp.pad(x_eo, ((0, 0), (0, dh), (1, dw), (0, 0))),
        jnp.pad(x_ee, ((0, 0), (0, dh), (0, dw + 1), (0, 0))),
    ], axis=-1)                                   # (B, Ho_pad, Wp1, 2C)

    # Band the even-row phase with a one-row halo per band (inflation 1/Th).
    if nb == 1:
        pe_b = pe.reshape(B, Th + 1, Wp1, K2)
        po_b = po.reshape(B, Th, Wp1, K2)
    else:
        pe_b = jnp.stack(
            [pe[:, t * Th: t * Th + Th + 1] for t in range(nb)], axis=1
        ).reshape(B * nb, Th + 1, Wp1, K2)
        po_b = po.reshape(B * nb, Th, Wp1, K2)

    # ---- Weights: six (2C, Cp) per-shift matrices, bf16, zero-padded -------
    w_t = jnp.transpose(conv_w, (2, 3, 1, 0)).astype(jnp.float32)  # (3,3,Cin,Cout)
    zero = jnp.zeros((C_in, C_out), jnp.float32)
    mats = [
        jnp.concatenate([w_t[0, 0], w_t[0, 1]], axis=0),
        jnp.concatenate([w_t[1, 0], w_t[1, 1]], axis=0),
        jnp.concatenate([w_t[2, 0], w_t[2, 1]], axis=0),
        jnp.concatenate([w_t[0, 2], zero], axis=0),
        jnp.concatenate([w_t[1, 2], zero], axis=0),
        jnp.concatenate([w_t[2, 2], zero], axis=0),
    ]
    w_mat = jnp.stack(mats, axis=0)                                # (6, 2C, Cout)
    w_mat = jnp.pad(w_mat, ((0, 0), (0, 0), (0, Cp - C_out))).astype(compute_dtype)

    # ---- Fused f32 params: bias / gamma / beta / channel mask --------------
    prm = jnp.zeros((8, Cp), jnp.float32)
    prm = prm.at[0, :C_out].set(conv_b.astype(jnp.float32))
    prm = prm.at[1, :C_out].set(ln_g.astype(jnp.float32))
    prm = prm.at[2, :C_out].set(ln_b.astype(jnp.float32))
    prm = prm.at[3, :C_out].set(1.0)

    kernel = functools.partial(_merge_kernel, th=Th, wo_p=Wo_p, c_out=C_out,
                               masked=(Cp != C_out))

    out = pl.pallas_call(
        kernel,
        out_shape=jax.ShapeDtypeStruct((B * nb, Th * Wo_p, Cp), out_dtype),
        grid_spec=pltpu.PrefetchScalarGridSpec(
            num_scalar_prefetch=0,
            grid=(B * nb,),
            in_specs=[
                pl.BlockSpec((None, Th + 1, Wp1, K2), lambda i: (i, 0, 0, 0)),
                pl.BlockSpec((None, Th, Wp1, K2), lambda i: (i, 0, 0, 0)),
                # Constant-index blocks (resident across the grid).
                # NOTE: pipeline_mode=pl.Buffered(1) would halve their VMEM
                # footprint (useful on v7x for large C); kept at the default
                # double-buffering for portability.
                pl.BlockSpec((6, K2, Cp), lambda i: (0, 0, 0)),
                pl.BlockSpec((8, Cp), lambda i: (0, 0)),
            ],
            out_specs=pl.BlockSpec((None, Th * Wo_p, Cp), lambda i: (i, 0, 0)),
        ),
        compiler_params=pltpu.CompilerParams(
            dimension_semantics=("parallel",),
            vmem_limit_bytes=vmem_limit),
    )(pe_b, po_b, w_mat, prm)

    # Trailing slice is a no-op when Ho_pad==Ho, Wo_p==Wo and Cp==C_out.
    out = out.reshape(B, Ho_pad, Wo_p, Cp)[:, :Ho, :Wo, :C_out]
    return out.reshape(B, Ho * Wo, C_out)


def _reference(x, conv_w, conv_b, ln_g, ln_b, compute_dtype=jnp.bfloat16):
    """Pure-JAX reference (lax.conv NCHW + LayerNorm); conv operands rounded to
    compute_dtype so it matches the kernel's bf16-operand / f32-accumulate path."""
    B, N, C_in = x.shape
    H = W = int(round(N ** 0.5))
    xq = x.astype(compute_dtype).astype(jnp.float32)
    wq = conv_w.astype(compute_dtype).astype(jnp.float32)
    x_nchw = jnp.transpose(xq, (0, 2, 1)).reshape(B, C_in, H, W)
    y = jax.lax.conv_general_dilated(
        x_nchw, wq, window_strides=(2, 2), padding=((1, 1), (1, 1)),
        dimension_numbers=("NCHW", "OIHW", "NCHW"),
        precision=jax.lax.Precision.HIGHEST,
    ) + conv_b.reshape(1, -1, 1, 1).astype(jnp.float32)
    B_, C_out = y.shape[:2]
    y = y.reshape(B_, C_out, -1).transpose(0, 2, 1)          # (B, Ho*Wo, C_out)
    mu = jnp.mean(y, axis=-1, keepdims=True)
    var = jnp.mean((y - mu) ** 2, axis=-1, keepdims=True)
    return (y - mu) * jax.lax.rsqrt(var + LN_EPS) * ln_g + ln_b


if __name__ == "__main__":
    key = jax.random.PRNGKey(0)
    B, H, W, dim, dim_out = 2, 16, 16, 4, 8
    k1, k2, k3, k4, k5 = jax.random.split(key, 5)

    x = jax.random.normal(k1, (B, H * W, dim), dtype=jnp.float32)
    conv_w = 0.1 * jax.random.normal(k2, (dim_out, dim, 3, 3), dtype=jnp.float32)
    conv_b = 0.1 * jax.random.normal(k3, (dim_out,), dtype=jnp.float32)
    ln_g = 1.0 + 0.05 * jax.random.normal(k4, (dim_out,), dtype=jnp.float32)
    ln_b = 0.05 * jax.random.normal(k5, (dim_out,), dtype=jnp.float32)

    out = merge_block(x, conv_w, conv_b, ln_g, ln_b)
    out = jax.block_until_ready(out)

    ref = _reference(x, conv_w, conv_b, ln_g, ln_b)
    assert out.shape == (B, ((H + 1) // 2) * ((W + 1) // 2), dim_out)
    assert jnp.max(jnp.abs(out - ref)) < 2e-3, "mismatch vs reference"

    print("KERNEL_OK")
</pallas_src>

<mosaic_0001>
module attributes {stable_mosaic.version = 11 : i64} {
  func.func @_merge_kernel(%arg0: i32, %arg1: memref<1x5x9x8xbf16, #tpu.memory_space<vmem>>, %arg2: memref<1x4x9x8xbf16, #tpu.memory_space<vmem>>, %arg3: memref<6x8x128xbf16, #tpu.memory_space<vmem>>, %arg4: memref<8x128xf32, #tpu.memory_space<vmem>>, %arg5: memref<1x32x128xf32, #tpu.memory_space<vmem>>) attributes {dimension_semantics = [#tpu.dimension_semantics<parallel>], iteration_bounds = array<i64: 4>, scalar_prefetch = 0 : i64, scratch_operands = 0 : i64, tpu.core_type = #tpu.core_type<tc>, window_params = [{transform_indices = @transform_0, window_bounds = array<i64: 1, 5, 9, 8>}, {transform_indices = @transform_1, window_bounds = array<i64: 1, 4, 9, 8>}, {pipeline_mode = #tpu.pipeline_mode<synchronous>, transform_indices = @transform_2, window_bounds = array<i64: 6, 8, 128>}, {pipeline_mode = #tpu.pipeline_mode<synchronous>, transform_indices = @transform_3, window_bounds = array<i64: 8, 128>}, {transform_indices = @transform_4, window_bounds = array<i64: 1, 32, 128>}]} {
    %c0 = arith.constant 0 : index
    %c0_0 = arith.constant 0 : index
    %c0_1 = arith.constant 0 : index
    %c0_2 = arith.constant 0 : index
    %0 = vector.load %arg1[%c0, %c0_0, %c0_1, %c0_2] : memref<1x5x9x8xbf16, #tpu.memory_space<vmem>>, vector<1x4x8x8xbf16>
    %1 = vector.shape_cast %0 : vector<1x4x8x8xbf16> to vector<4x8x8xbf16>
    %2 = vector.shape_cast %1 : vector<4x8x8xbf16> to vector<32x8xbf16>
    %c0_3 = arith.constant 0 : index
    %c0_4 = arith.constant 0 : index
    %c0_5 = arith.constant 0 : index
    %3 = vector.load %arg3[%c0_3, %c0_4, %c0_5] : memref<6x8x128xbf16, #tpu.memory_space<vmem>>, vector<1x8x128xbf16>
    %4 = vector.shape_cast %3 : vector<1x8x128xbf16> to vector<8x128xbf16>
    %cst = arith.constant dense<0.000000e+00> : vector<32x128xf32>
    %5 = tpu.matmul %2, %4, %cst {dimension_numbers = #tpu.dot_dimension_numbers<[1], [0], [0], [1], [0, 0, 1, 1], [], []>} : vector<32x8xbf16>, vector<8x128xbf16>, vector<32x128xf32> -> vector<32x128xf32>
    %c0_6 = arith.constant 0 : index
    %c0_7 = arith.constant 0 : index
    %c0_8 = arith.constant 0 : index
    %c0_9 = arith.constant 0 : index
    %6 = vector.load %arg2[%c0_6, %c0_7, %c0_8, %c0_9] : memref<1x4x9x8xbf16, #tpu.memory_space<vmem>>, vector<1x4x8x8xbf16>
    %7 = vector.shape_cast %6 : vector<1x4x8x8xbf16> to vector<4x8x8xbf16>
    %8 = vector.shape_cast %7 : vector<4x8x8xbf16> to vector<32x8xbf16>
    %c1 = arith.constant 1 : index
    %c0_10 = arith.constant 0 : index
    %c0_11 = arith.constant 0 : index
    %9 = vector.load %arg3[%c1, %c0_10, %c0_11] : memref<6x8x128xbf16, #tpu.memory_space<vmem>>, vector<1x8x128xbf16>
    %10 = vector.shape_cast %9 : vector<1x8x128xbf16> to vector<8x128xbf16>
    %cst_12 = arith.constant dense<0.000000e+00> : vector<32x128xf32>
    %11 = tpu.matmul %8, %10, %cst_12 {dimension_numbers = #tpu.dot_dimension_numbers<[1], [0], [0], [1], [0, 0, 1, 1], [], []>} : vector<32x8xbf16>, vector<8x128xbf16>, vector<32x128xf32> -> vector<32x128xf32>
    %12 = arith.addf %5, %11 : vector<32x128xf32>
    %c0_13 = arith.constant 0 : index
    %c1_14 = arith.constant 1 : index
    %c0_15 = arith.constant 0 : index
    %c0_16 = arith.constant 0 : index
    %13 = vector.load %arg1[%c0_13, %c1_14, %c0_15, %c0_16] : memref<1x5x9x8xbf16, #tpu.memory_space<vmem>>, vector<1x4x8x8xbf16>
    %14 = vector.shape_cast %13 : vector<1x4x8x8xbf16> to vector<4x8x8xbf16>
    %15 = vector.shape_cast %14 : vector<4x8x8xbf16> to vector<32x8xbf16>
    %c2 = arith.constant 2 : index
    %c0_17 = arith.constant 0 : index
    %c0_18 = arith.constant 0 : index
    %16 = vector.load %arg3[%c2, %c0_17, %c0_18] : memref<6x8x128xbf16, #tpu.memory_space<vmem>>, vector<1x8x128xbf16>
    %17 = vector.shape_cast %16 : vector<1x8x128xbf16> to vector<8x128xbf16>
    %cst_19 = arith.constant dense<0.000000e+00> : vector<32x128xf32>
    %18 = tpu.matmul %15, %17, %cst_19 {dimension_numbers = #tpu.dot_dimension_numbers<[1], [0], [0], [1], [0, 0, 1, 1], [], []>} : vector<32x8xbf16>, vector<8x128xbf16>, vector<32x128xf32> -> vector<32x128xf32>
    %19 = arith.addf %12, %18 : vector<32x128xf32>
    %c0_20 = arith.constant 0 : index
    %c0_21 = arith.constant 0 : index
    %c1_22 = arith.constant 1 : index
    %c0_23 = arith.constant 0 : index
    %20 = vector.load %arg1[%c0_20, %c0_21, %c1_22, %c0_23] : memref<1x5x9x8xbf16, #tpu.memory_space<vmem>>, vector<1x4x8x8xbf16>
    %21 = vector.shape_cast %20 : vector<1x4x8x8xbf16> to vector<4x8x8xbf16>
    %22 = vector.shape_cast %21 : vector<4x8x8xbf16> to vector<32x8xbf16>
    %c3 = arith.constant 3 : index
    %c0_24 = arith.constant 0 : index
    %c0_25 = arith.constant 0 : index
    %23 = vector.load %arg3[%c3, %c0_24, %c0_25] : memref<6x8x128xbf16, #tpu.memory_space<vmem>>, vector<1x8x128xbf16>
    %24 = vector.shape_cast %23 : vector<1x8x128xbf16> to vector<8x128xbf16>
    %cst_26 = arith.constant dense<0.000000e+00> : vector<32x128xf32>
    %25 = tpu.matmul %22, %24, %cst_26 {dimension_numbers = #tpu.dot_dimension_numbers<[1], [0], [0], [1], [0, 0, 1, 1], [], []>} : vector<32x8xbf16>, vector<8x128xbf16>, vector<32x128xf32> -> vector<32x128xf32>
    %26 = arith.addf %19, %25 : vector<32x128xf32>
    %c0_27 = arith.constant 0 : index
    %c0_28 = arith.constant 0 : index
    %c1_29 = arith.constant 1 : index
    %c0_30 = arith.constant 0 : index
    %27 = vector.load %arg2[%c0_27, %c0_28, %c1_29, %c0_30] : memref<1x4x9x8xbf16, #tpu.memory_space<vmem>>, vector<1x4x8x8xbf16>
    %28 = vector.shape_cast %27 : vector<1x4x8x8xbf16> to vector<4x8x8xbf16>
    %29 = vector.shape_cast %28 : vector<4x8x8xbf16> to vector<32x8xbf16>
    %c4 = arith.constant 4 : index
    %c0_31 = arith.constant 0 : index
    %c0_32 = arith.constant 0 : index
    %30 = vector.load %arg3[%c4, %c0_31, %c0_32] : memref<6x8x128xbf16, #tpu.memory_space<vmem>>, vector<1x8x128xbf16>
    %31 = vector.shape_cast %30 : vector<1x8x128xbf16> to vector<8x128xbf16>
    %cst_33 = arith.constant dense<0.000000e+00> : vector<32x128xf32>
    %32 = tpu.matmul %29, %31, %cst_33 {dimension_numbers = #tpu.dot_dimension_numbers<[1], [0], [0], [1], [0, 0, 1, 1], [], []>} : vector<32x8xbf16>, vector<8x128xbf16>, vector<32x128xf32> -> vector<32x128xf32>
    %33 = arith.addf %26, %32 : vector<32x128xf32>
    %c0_34 = arith.constant 0 : index
    %c1_35 = arith.constant 1 : index
    %c1_36 = arith.constant 1 : index
    %c0_37 = arith.constant 0 : index
    %34 = vector.load %arg1[%c0_34, %c1_35, %c1_36, %c0_37] : memref<1x5x9x8xbf16, #tpu.memory_space<vmem>>, vector<1x4x8x8xbf16>
    %35 = vector.shape_cast %34 : vector<1x4x8x8xbf16> to vector<4x8x8xbf16>
    %36 = vector.shape_cast %35 : vector<4x8x8xbf16> to vector<32x8xbf16>
    %c5 = arith.constant 5 : index
    %c0_38 = arith.constant 0 : index
    %c0_39 = arith.constant 0 : index
    %37 = vector.load %arg3[%c5, %c0_38, %c0_39] : memref<6x8x128xbf16, #tpu.memory_space<vmem>>, vector<1x8x128xbf16>
    %38 = vector.shape_cast %37 : vector<1x8x128xbf16> to vector<8x128xbf16>
    %cst_40 = arith.constant dense<0.000000e+00> : vector<32x128xf32>
    %39 = tpu.matmul %36, %38, %cst_40 {dimension_numbers = #tpu.dot_dimension_numbers<[1], [0], [0], [1], [0, 0, 1, 1], [], []>} : vector<32x8xbf16>, vector<8x128xbf16>, vector<32x128xf32> -> vector<32x128xf32>
    %40 = arith.addf %33, %39 : vector<32x128xf32>
    %c0_41 = arith.constant 0 : index
    %c0_42 = arith.constant 0 : index
    %41 = vector.load %arg4[%c0_41, %c0_42] : memref<8x128xf32, #tpu.memory_space<vmem>>, vector<8x128xf32>
    %42 = vector.extract_strided_slice %41 {offsets = [0, 0], sizes = [1, 128], strides = [1, 1]} : vector<8x128xf32> to vector<1x128xf32>
    %43 = vector.broadcast %42 : vector<1x128xf32> to vector<32x128xf32>
    %44 = arith.addf %40, %43 : vector<32x128xf32>
    %cst_43 = arith.constant dense<0.000000e+00> : vector<32xf32>
    %45 = vector.multi_reduction <add>, %44, %cst_43 [1] : vector<32x128xf32> to vector<32xf32>
    %46 = vector.shape_cast %45 : vector<32xf32> to vector<32x1xf32>
    %cst_44 = arith.constant 1.250000e-01 : f32
    %47 = vector.broadcast %cst_44 : f32 to vector<32x1xf32>
    %48 = arith.mulf %46, %47 : vector<32x1xf32>
    %49 = vector.broadcast %48 : vector<32x1xf32> to vector<32x128xf32>
    %50 = arith.subf %44, %49 : vector<32x128xf32>
    %51 = vector.extract_strided_slice %41 {offsets = [3, 0], sizes = [1, 128], strides = [1, 1]} : vector<8x128xf32> to vector<1x128xf32>
    %52 = vector.broadcast %51 : vector<1x128xf32> to vector<32x128xf32>
    %53 = arith.mulf %50, %52 : vector<32x128xf32>
    %54 = arith.mulf %53, %53 : vector<32x128xf32>
    %cst_45 = arith.constant dense<0.000000e+00> : vector<32xf32>
    %55 = vector.multi_reduction <add>, %54, %cst_45 [1] : vector<32x128xf32> to vector<32xf32>
    %56 = vector.shape_cast %55 : vector<32xf32> to vector<32x1xf32>
    %cst_46 = arith.constant 1.250000e-01 : f32
    %57 = vector.broadcast %cst_46 : f32 to vector<32x1xf32>
    %58 = arith.mulf %56, %57 : vector<32x1xf32>
    %cst_47 = arith.constant 9.99999974E-6 : f32
    %59 = vector.broadcast %cst_47 : f32 to vector<32x1xf32>
    %60 = arith.addf %58, %59 : vector<32x1xf32>
    %61 = math.rsqrt %60 : vector<32x1xf32>
    %62 = vector.broadcast %61 : vector<32x1xf32> to vector<32x128xf32>
    %63 = arith.mulf %53, %62 : vector<32x128xf32>
    %64 = vector.extract_strided_slice %41 {offsets = [1, 0], sizes = [1, 128], strides = [1, 1]} : vector<8x128xf32> to vector<1x128xf32>
    %65 = vector.broadcast %64 : vector<1x128xf32> to vector<32x128xf32>
    %66 = arith.mulf %63, %65 : vector<32x128xf32>
    %67 = vector.extract_strided_slice %41 {offsets = [2, 0], sizes = [1, 128], strides = [1, 1]} : vector<8x128xf32> to vector<1x128xf32>
    %68 = vector.broadcast %67 : vector<1x128xf32> to vector<32x128xf32>
    %69 = arith.addf %66, %68 : vector<32x128xf32>
    %c0_48 = arith.constant 0 : index
    %c0_49 = arith.constant 0 : index
    %c0_50 = arith.constant 0 : index
    %70 = vector.load %arg5[%c0_48, %c0_49, %c0_50] : memref<1x32x128xf32, #tpu.memory_space<vmem>>, vector<1x32x128xf32>
    %71 = vector.shape_cast %70 : vector<1x32x128xf32> to vector<32x128xf32>
    %72 = vector.shape_cast %69 : vector<32x128xf32> to vector<1x32x128xf32>
    tpu.vector_store %arg5[%c0_48, %c0_49, %c0_50], %72 {strides = array<i32>} : memref<1x32x128xf32, #tpu.memory_space<vmem>>, vector<1x32x128xf32>,
    return
  }
  func.func @transform_0(%arg0: i32) -> (i32, i32, i32, i32) {
    %c0_i32 = arith.constant 0 : i32
    %c0_i32_0 = arith.constant 0 : i32
    %c0_i32_1 = arith.constant 0 : i32
    %c0_i32_2 = arith.constant 0 : i32
    return %arg0, %c0_i32, %c0_i32_0, %c0_i32_1 : i32, i32, i32, i32
  }
  func.func @transform_1(%arg0: i32) -> (i32, i32, i32, i32) {
    %c0_i32 = arith.constant 0 : i32
    %c0_i32_0 = arith.constant 0 : i32
    %c0_i32_1 = arith.constant 0 : i32
    %c0_i32_2 = arith.constant 0 : i32
    return %arg0, %c0_i32, %c0_i32_0, %c0_i32_1 : i32, i32, i32, i32
  }
  func.func @transform_2(%arg0: i32) -> (i32, i32, i32) {
    %c0_i32 = arith.constant 0 : i32
    %c0_i32_0 = arith.constant 0 : i32
    %c0_i32_1 = arith.constant 0 : i32
    %c0_i32_2 = arith.constant 0 : i32
    return %c0_i32, %c0_i32_0, %c0_i32_1 : i32, i32, i32
  }
  func.func @transform_3(%arg0: i32) -> (i32, i32) {
    %c0_i32 = arith.constant 0 : i32
    %c0_i32_0 = arith.constant 0 : i32
    %c0_i32_1 = arith.constant 0 : i32
    return %c0_i32, %c0_i32_0 : i32, i32
  }
  func.func @transform_4(%arg0: i32) -> (i32, i32, i32) {
    %c0_i32 = arith.constant 0 : i32
    %c0_i32_0 = arith.constant 0 : i32
    %c0_i32_1 = arith.constant 0 : i32
    return %arg0, %c0_i32, %c0_i32_0 : i32, i32, i32
  }
}

</mosaic_0001>

<llo_original>
// kernel: tpu_custom_call.1
$region0: #{tpu_custom_call.1}
  #allocation0 [shape = 'u32[]', space=smem, size = 0x4, offset = 0x4, fixed_abs, tag = 'smem constant byte address 0x4 - core index']
  #allocation1 [shape = 'u32[144,128]{1,0:T(1,128)}', space=vmem, size = 0x12000, scoped, tag = 'internal scratch']
  %s0 = inlined_call_operand.vmem [shape: bf16[4,5,9,8], index: 0, kind: input, shape index: {}]
  %s1 = inlined_call_operand.vmem [shape: bf16[4,4,9,8], index: 1, kind: input, shape index: {}]
  %s2 = inlined_call_operand.vmem [shape: bf16[6,8,128], index: 2, kind: input, shape index: {}]
  %s3 = inlined_call_operand.vmem [shape: f32[8,128], index: 3, kind: input, shape index: {}]
  %s4 = inlined_call_operand.hbm [shape: f32[4,32,128], index: 4, kind: output, shape index: {}]
  %s5 = sld [smem:[#allocation0]]
  $region49: #{tpu_custom_call.1} parent=0
    _
  %s7 = ssub.s32 1, %s5
  %s8 = scalar_select 0, %s7, %s5
  $region1: #{tpu_custom_call.1} parent=0
    #allocation2 [shape = 'u8[32768]{0}', space=vmem, size = 0x8000, scoped, tag = 'output window, operand 0']
    #allocation3 [shape = 's32[2]{0}', space=sflag, size = 0x8, scoped, tag = 'scoped memory for tpu_custom_call.1']
    %9 = vsyncpa [#allocation3], 0
    %s10 = scalar_lea.sflag [#allocation3], 1
    %11 = vsyncpa %s10, 0
    loop: start=0, step=1, limit=6
    $region2: #{tpu_custom_call.1} parent=1 // loop_pre_header
      _
    $region3: #{tpu_custom_call.1} parent=1 // loop_header
      %s13 = sphi 0, %s17
      %p14 = scmp.ge.s32.totalorder %s13, 6
      %s23 = sphi 0, %s25
      %s26 = sphi 0, %s23
      %s27 = sphi 0, %s26
      %s43 = sphi 0, %s27
      %s49 = sphi 0, %s51
      %s52 = sphi 0, %s49
      %s53 = sphi 0, %s52
      %s69 = sphi 0, %s53
      %s73 = sphi 0, %s73
      %s75 = sphi 0, %s73
      %s76 = sphi 0, %s75
      %s90 = sphi 0, %s76
      %s94 = sphi 0, %s94
      %s96 = sphi 0, %s94
      %s97 = sphi 0, %s96
      %s111 = sphi 0, %s97
      %s117 = sphi 0, %s119
      %s120 = sphi 0, %s117
      %s121 = sphi 0, %s120
      %s137 = sphi 0, %s121
    $region4: #{tpu_custom_call.1} parent=1 // loop_header_branch
      %16 = sbr.rel (%p14) target = $region8
    $region5: #{tpu_custom_call.1} parent=1 // loop_body
      %s18 = ssub.s32 %s13, 1
      %s19 = ssub.s32 %s13, 2
      %s20 = sadd.s32 %s13, 1
      %s21 = ssub.s32 %s13, %s20
      %p22 = scmp.eq.s32.totalorder %s21, 0
      %s24 = sadd.s32 %s23, 1
      %s25 = scalar_select %p22, %s23, %s24
      %p28 = pneg %p22
      %p29 = scmp.eq.s32.totalorder %s13, 3
      %p30 = por %p28, %p29
      %p31 = scmp.ne.s32.totalorder %s23, %s26
      %p32 = scmp.eq.s32.totalorder %s13, 0
      %p33 = por %p31, %p32
      %p34 = scmp.ne.s32.totalorder %s23, %s26
      %p35 = scmp.eq.s32.totalorder %s18, 3
      %p36 = por %p34, %p35
      %p37 = scmp.ne.s32.totalorder %s26, %s27
      %p38 = scmp.eq.s32.totalorder %s18, 0
      %p39 = por %p37, %p38
      %p40 = scmp.ne.s32.totalorder %s26, %s27
      %p41 = scmp.eq.s32.totalorder %s19, 3
      %p42 = por %p40, %p41
      %p44 = scmp.ne.s32.totalorder %s27, %s43
      %p45 = scmp.eq.s32.totalorder %s19, 0
      %p46 = por %p44, %p45
      %s47 = ssub.s32 %s13, %s20
      %p48 = scmp.eq.s32.totalorder %s47, 0
      %s50 = sadd.s32 %s49, 1
      %s51 = scalar_select %p48, %s49, %s50
      %p54 = pneg %p48
      %p55 = scmp.eq.s32.totalorder %s13, 3
      %p56 = por %p54, %p55
      %p57 = scmp.ne.s32.totalorder %s49, %s52
      %p58 = scmp.eq.s32.totalorder %s13, 0
      %p59 = por %p57, %p58
      %p60 = scmp.ne.s32.totalorder %s49, %s52
      %p61 = scmp.eq.s32.totalorder %s18, 3
      %p62 = por %p60, %p61
      %p63 = scmp.ne.s32.totalorder %s52, %s53
      %p64 = scmp.eq.s32.totalorder %s18, 0
      %p65 = por %p63, %p64
      %p66 = scmp.ne.s32.totalorder %s52, %s53
      %p67 = scmp.eq.s32.totalorder %s19, 3
      %p68 = por %p66, %p67
      %p70 = scmp.ne.s32.totalorder %s53, %s69
      %p71 = scmp.eq.s32.totalorder %s19, 0
      %p72 = por %p70, %p71
      %s74 = sadd.s32 %s73, 1
      %p77 = scmp.eq.s32.totalorder %s13, 3
      %p78 = scmp.ne.s32.totalorder %s73, %s75
      %p79 = scmp.eq.s32.totalorder %s13, 0
      %p80 = por %p78, %p79
      %p81 = scmp.ne.s32.totalorder %s73, %s75
      %p82 = scmp.eq.s32.totalorder %s18, 3
      %p83 = por %p81, %p82
      %p84 = scmp.ne.s32.totalorder %s75, %s76
      %p85 = scmp.eq.s32.totalorder %s18, 0
      %p86 = por %p84, %p85
      %p87 = scmp.ne.s32.totalorder %s75, %s76
      %p88 = scmp.eq.s32.totalorder %s19, 3
      %p89 = por %p87, %p88
      %p91 = scmp.ne.s32.totalorder %s76, %s90
      %p92 = scmp.eq.s32.totalorder %s19, 0
      %p93 = por %p91, %p92
      %s95 = sadd.s32 %s94, 1
      %p98 = scmp.eq.s32.totalorder %s13, 3
      %p99 = scmp.ne.s32.totalorder %s94, %s96
      %p100 = scmp.eq.s32.totalorder %s13, 0
      %p101 = por %p99, %p100
      %p102 = scmp.ne.s32.totalorder %s94, %s96
      %p103 = scmp.eq.s32.totalorder %s18, 3
      %p104 = por %p102, %p103
      %p105 = scmp.ne.s32.totalorder %s96, %s97
      %p106 = scmp.eq.s32.totalorder %s18, 0
      %p107 = por %p105, %p106
      %p108 = scmp.ne.s32.totalorder %s96, %s97
      %p109 = scmp.eq.s32.totalorder %s19, 3
      %p110 = por %p108, %p109
      %p112 = scmp.ne.s32.totalorder %s97, %s111
      %p113 = scmp.eq.s32.totalorder %s19, 0
      %p114 = por %p112, %p113
      %s115 = ssub.s32 %s13, %s20
      %p116 = scmp.eq.s32.totalorder %s115, 0
      %s118 = sadd.s32 %s117, 1
      %s119 = scalar_select %p116, %s117, %s118
      %p122 = pneg %p116
      %p123 = scmp.eq.s32.totalorder %s13, 3
      %p124 = por %p122, %p123
      %p125 = scmp.ne.s32.totalorder %s117, %s120
      %p126 = scmp.eq.s32.totalorder %s13, 0
      %p127 = por %p125, %p126
      %p128 = scmp.ne.s32.totalorder %s117, %s120
      %p129 = scmp.eq.s32.totalorder %s18, 3
      %p130 = por %p128, %p129
      %p131 = scmp.ne.s32.totalorder %s120, %s121
      %p132 = scmp.eq.s32.totalorder %s18, 0
      %p133 = por %p131, %p132
      %p134 = scmp.ne.s32.totalorder %s120, %s121
      %p135 = scmp.eq.s32.totalorder %s19, 3
      %p136 = por %p134, %p135
      %p138 = scmp.ne.s32.totalorder %s121, %s137
      %p139 = scmp.eq.s32.totalorder %s19, 0
      %p140 = por %p138, %p139
      %p141 = scmp.le.s32.totalorder 1, %s13
      %p142 = scmp.lt.s32.totalorder %s13, 5
      %p143 = pnand %p141, %p142
      %p144 = pneg %p143
      // Predicated region
      $region9: #{tpu_custom_call.1} parent=5 // pred_check
        _
      $region10: #{tpu_custom_call.1} parent=5 // pred_check_branch
        %146 = sbr.rel (%p143) target = $region12
      $region11: #{tpu_custom_call.1} parent=5 // pred_region
        %s147 = ssub.s32 %s13, 1
        // Predicated region
        $region13: #{tpu_custom_call.1} parent=11 // pred_check
          %p148 = pneg %p86
        $region14: #{tpu_custom_call.1} parent=11 // pred_check_branch
          %150 = sbr.rel (%p148) target = $region16
        $region15: #{tpu_custom_call.1} parent=11 // pred_region
          _
        $region16: #{tpu_custom_call.1} parent=11 // pred_fallthru
          _
        // Predicated region
        $region17: #{tpu_custom_call.1} parent=11 // pred_check
          %p151 = pneg %p107
        $region18: #{tpu_custom_call.1} parent=11 // pred_check_branch
          %153 = sbr.rel (%p151) target = $region20
        $region19: #{tpu_custom_call.1} parent=11 // pred_region
          _
        $region20: #{tpu_custom_call.1} parent=11 // pred_fallthru
          _
      $region12: #{tpu_custom_call.1} parent=5 // pred_fallthru
        _
      %p154 = scmp.lt.s32.totalorder %s13, 4
      // Predicated region
      $region21: #{tpu_custom_call.1} parent=5 // pred_check
        %p155 = pneg %p154
      $region22: #{tpu_custom_call.1} parent=5 // pred_check_branch
        %157 = sbr.rel (%p155) target = $region24
      $region23: #{tpu_custom_call.1} parent=5 // pred_region
        // Predicated region
        $region25: #{tpu_custom_call.1} parent=23 // pred_check
          %p158 = pneg %p33
        $region26: #{tpu_custom_call.1} parent=23 // pred_check_branch
          %160 = sbr.rel (%p158) target = $region28
        $region27: #{tpu_custom_call.1} parent=23 // pred_region
          %p161 = scmp.lt.s32.totalorder %s13, 3
          %s162 = scalar_select %p161, %s13, 3
          %s163 = smul.addr %s162, 10
          %s164 = smul.addr %s163, 4
          %s165 = scalar_lea.vmem %s0, %s164
        $region28: #{tpu_custom_call.1} parent=23 // pred_fallthru
          _
        // Predicated region
        $region29: #{tpu_custom_call.1} parent=23 // pred_check
          %p166 = pneg %p59
        $region30: #{tpu_custom_call.1} parent=23 // pred_check_branch
          %168 = sbr.rel (%p166) target = $region32
        $region31: #{tpu_custom_call.1} parent=23 // pred_region
          %p169 = scmp.lt.s32.totalorder %s13, 3
          %s170 = scalar_select %p169, %s13, 3
          %s171 = smul.addr %s170, 8
          %s172 = smul.addr %s171, 4
          %s173 = scalar_lea.vmem %s1, %s172
        $region32: #{tpu_custom_call.1} parent=23 // pred_fallthru
          _
      $region24: #{tpu_custom_call.1} parent=5 // pred_fallthru
        _
      %p174 = scmp.le.s32.totalorder 1, %s13
      %p175 = scmp.lt.s32.totalorder %s13, 5
      %p176 = pnand %p174, %p175
      %p177 = pneg %p176
      // Predicated region
      $region33: #{tpu_custom_call.1} parent=5 // pred_check
        _
      $region34: #{tpu_custom_call.1} parent=5 // pred_check_branch
        %179 = sbr.rel (%p176) target = $region36
      $region35: #{tpu_custom_call.1} parent=5 // pred_region
        %s180 = ssub.s32 %s13, 1
        %p181 = scmp.lt.s32.totalorder %s18, 3
        %s182 = scalar_select %p181, %s18, 3
        %s183 = smul.addr %s182, 10
        %s184 = smul.addr %s183, 4
        %s185 = scalar_lea.vmem %s0, %s184
        %p186 = pneg %p39
        %p187 = pneg %p36
        %p188 = scmp.lt.s32.totalorder %s18, 3
        %s189 = scalar_select %p188, %s18, 3
        %s190 = smul.addr %s189, 8
        %s191 = smul.addr %s190, 4
        %s192 = scalar_lea.vmem %s1, %s191
        %p193 = pneg %p65
        %p194 = pneg %p62
        %p195 = pneg %p86
        %p196 = pneg %p83
        %p197 = pneg %p107
        %p198 = pneg %p104
        %p199 = pneg %p133
        %p200 = pneg %p130
        %s201 = sand.u32 %s120, 1
        %s202 = scalar_lea.sflag [#allocation3], %s201
        %s203 = sand.u32 %s120, 1
        %s204 = smul.addr %s203, 32
        %s205 = scalar_lea.vmem [#allocation2], %s204
        %p206 = scmp.lt.s32.totalorder %s18, 3
        %s207 = scalar_select %p206, %s18, 3
        %s208 = smul.addr %s207, 10
        %s209 = smul.addr %s208, 4
        %s210 = scalar_lea.vmem %s0, %s209
        %p211 = scmp.lt.s32.totalorder %s18, 3
        %s212 = scalar_select %p211, %s18, 3
        %s213 = smul.addr %s212, 8
        %s214 = smul.addr %s213, 4
        %s215 = scalar_lea.vmem %s1, %s214
        %v217 = vld [vmem:[%s210] sm:$0xf]
        %v218 = vld [vmem:[%s210 + $0x8] sm:$0xf]
        %v219 = vld [vmem:[%s210 + $0x10] sm:$0xf]
        %v220 = vld [vmem:[%s210 + $0x18] sm:$0xf]
        %v221 = vld [vmem:[%s2] sm:$0xf]
        %v222 = vld [vmem:[%s215] sm:$0xf]
        %v223 = vld [vmem:[%s215 + $0x8] sm:$0xf]
        %v224 = vld [vmem:[%s215 + $0x10] sm:$0xf]
        %v225 = vld [vmem:[%s215 + $0x18] sm:$0xf]
        %s226 = scalar_lea.vmem %s2, 4
        %v227 = vld [vmem:[%s226] sm:$0xf]
        %v232 = vunpack.c.l.b16 %v222
        %v233 = vunpack.c.l.b16 %v223
        %v234 = vunpack.c.l.b16 %v224
        %v235 = vunpack.c.l.b16 %v225
        %v236 = vpack.c.b16 %v233, %v232
        %v237 = vpack.c.b16 %v235, %v234
        %vm238 = vcmask 64512
        %v240 = vsel %vm238, %v236, 0
        %v243 = vsel %vm238, %v237, 0
        %vm245 = vcmask 1043456
        %v247 = vsel %vm245, %v227, 0
        %249 = vmatprep.subr.bf16.mxu0 0
        %250 = vmatpush1.bf16.msra.mxu0 %v247
        %251 = vmatprep.subr.bf16.mxu0 0
        %252 = vmatpush1.bf16.msra.mxu0 0
        %253 = vmatprep.subr.bf16.mxu0 0
        %254 = vmatpush1.bf16.msra.mxu0 0
        %255 = vmatprep.subr.bf16.mxu0 0
        %256 = vmatpush1.bf16.msra.mxu0 0
        %257 = vmatprep.subr.bf16.mxu0 0
        %258 = vmatpush1.bf16.msra.mxu0 0
        %259 = vmatprep.subr.bf16.mxu0 0
        %260 = vmatpush1.bf16.msra.mxu0 0
        %261 = vmatprep.subr.bf16.mxu0 0
        %262 = vmatpush1.bf16.msra.mxu0 0
        %263 = vmatprep.subr.bf16.mxu0 0
        %264 = vmatpush1.bf16.msra.mxu0 0
        %265 = vmatprep.subr.bf16.mxu0 0
        %266 = vmatpush1.bf16.msra.mxu0 0
        %267 = vmatprep.subr.bf16.mxu0 0
        %268 = vmatpush1.bf16.msra.mxu0 0
        %269 = vmatprep.subr.bf16.mxu0 0
        %270 = vmatpush1.bf16.msra.mxu0 0
        %271 = vmatprep.subr.bf16.mxu0 0
        %272 = vmatpush1.bf16.msra.mxu0 0
        %273 = vmatprep.subr.bf16.mxu0 0
        %274 = vmatpush1.bf16.msra.mxu0 0
        %275 = vmatprep.subr.bf16.mxu0 0
        %276 = vmatpush1.bf16.msra.mxu0 0
        %277 = vmatprep.subr.bf16.mxu0 0
        %278 = vmatpush1.bf16.msra.mxu0 0
        %279 = vmatprep.subr.bf16.mxu0 0
        %280 = vmatpush1.bf16.msra.mxu0 0
        %281 = vmatprep.mubr.bf16.mxu0 0
        %282 = vmatmul.mubr.bf16.gmra.mrb[0].mxu0 %v240
        %v283 = vpop.f32.mrb[0].mxu0
        %v284 = vadd.f32 0.0, %v283
        %v285 = vpop.f32.mrb[0].mxu0
        %v286 = vpop.f32.mrb[0].mxu0
        %v287 = vadd.f32 0.0, %v286
        %v288 = vpop.f32.mrb[0].mxu0
        %289 = vmatprep.mubr.bf16.mxu0 0
        %290 = vmatmul.mubr.bf16.gmra.mrb[0].mxu0 %v243
        %v291 = vpop.f32.mrb[0].mxu0
        %v292 = vadd.f32 0.0, %v291
        %v293 = vpop.f32.mrb[0].mxu0
        %v294 = vpop.f32.mrb[0].mxu0
        %v295 = vadd.f32 0.0, %v294
        %v296 = vpop.f32.mrb[0].mxu0
        %297 = vdwg.mxu0
        %v302 = vunpack.c.l.b16 %v217
        %v303 = vunpack.c.l.b16 %v218
        %v304 = vunpack.c.l.b16 %v219
        %v305 = vunpack.c.l.b16 %v220
        %v306 = vpack.c.b16 %v303, %v302
        %v307 = vpack.c.b16 %v305, %v304
        %v309 = vsel %vm238, %v306, 0
        %v312 = vsel %vm238, %v307, 0
        %v315 = vsel %vm245, %v221, 0
        %317 = vmatprep.subr.bf16.mxu0 0
        %318 = vmatpush1.bf16.msra.mxu0 %v315
        %319 = vmatprep.subr.bf16.mxu0 0
        %320 = vmatpush1.bf16.msra.mxu0 0
        %321 = vmatprep.subr.bf16.mxu0 0
        %322 = vmatpush1.bf16.msra.mxu0 0
        %323 = vmatprep.subr.bf16.mxu0 0
        %324 = vmatpush1.bf16.msra.mxu0 0
        %325 = vmatprep.subr.bf16.mxu0 0
        %326 = vmatpush1.bf16.msra.mxu0 0
        %327 = vmatprep.subr.bf16.mxu0 0
        %328 = vmatpush1.bf16.msra.mxu0 0
        %329 = vmatprep.subr.bf16.mxu0 0
        %330 = vmatpush1.bf16.msra.mxu0 0
        %331 = vmatprep.subr.bf16.mxu0 0
        %332 = vmatpush1.bf16.msra.mxu0 0
        %333 = vmatprep.subr.bf16.mxu0 0
        %334 = vmatpush1.bf16.msra.mxu0 0
        %335 = vmatprep.subr.bf16.mxu0 0
        %336 = vmatpush1.bf16.msra.mxu0 0
        %337 = vmatprep.subr.bf16.mxu0 0
        %338 = vmatpush1.bf16.msra.mxu0 0
        %339 = vmatprep.subr.bf16.mxu0 0
        %340 = vmatpush1.bf16.msra.mxu0 0
        %341 = vmatprep.subr.bf16.mxu0 0
        %342 = vmatpush1.bf16.msra.mxu0 0
        %343 = vmatprep.subr.bf16.mxu0 0
        %344 = vmatpush1.bf16.msra.mxu0 0
        %345 = vmatprep.subr.bf16.mxu0 0
        %346 = vmatpush1.bf16.msra.mxu0 0
        %347 = vmatprep.subr.bf16.mxu0 0
        %348 = vmatpush1.bf16.msra.mxu0 0
        %349 = vmatprep.mubr.bf16.mxu0 0
        %350 = vmatmul.mubr.bf16.gmra.mrb[0].mxu0 %v309
        %v351 = vpop.f32.mrb[0].mxu0
        %v352 = vadd.f32 %v284, %v351
        %v353 = vpop.f32.mrb[0].mxu0
        %v354 = vpop.f32.mrb[0].mxu0
        %v355 = vadd.f32 %v287, %v354
        %v356 = vpop.f32.mrb[0].mxu0
        %357 = vmatprep.mubr.bf16.mxu0 0
        %358 = vmatmul.mubr.bf16.gmra.mrb[0].mxu0 %v312
        %v359 = vpop.f32.mrb[0].mxu0
        %v360 = vadd.f32 %v292, %v359
        %v361 = vpop.f32.mrb[0].mxu0
        %v362 = vpop.f32.mrb[0].mxu0
        %v363 = vadd.f32 %v295, %v362
        %v364 = vpop.f32.mrb[0].mxu0
        %365 = vdwg.mxu0
        %s366 = scalar_lea.vmem %s210, 8
        %v367 = vld [vmem:[%s366] sm:$0xf]
        %v368 = vld [vmem:[%s366 + $0x8] sm:$0xf]
        %v369 = vld [vmem:[%s366 + $0x10] sm:$0xf]
        %v370 = vld [vmem:[%s366 + $0x18] sm:$0xf]
        %s371 = scalar_lea.vmem %s2, 8
        %v372 = vld [vmem:[%s371] sm:$0xf]
        %v377 = vunpack.c.l.b16 %v367
        %v378 = vunpack.c.l.b16 %v368
        %v379 = vunpack.c.l.b16 %v369
        %v380 = vunpack.c.l.b16 %v370
        %v381 = vpack.c.b16 %v378, %v377
        %v382 = vpack.c.b16 %v380, %v379
        %v384 = vsel %vm238, %v381, 0
        %v387 = vsel %vm238, %v382, 0
        %v390 = vsel %vm245, %v372, 0
        %392 = vmatprep.subr.bf16.mxu0 0
        %393 = vmatpush1.bf16.msra.mxu0 %v390
        %394 = vmatprep.subr.bf16.mxu0 0
        %395 = vmatpush1.bf16.msra.mxu0 0
        %396 = vmatprep.subr.bf16.mxu0 0
        %397 = vmatpush1.bf16.msra.mxu0 0
        %398 = vmatprep.subr.bf16.mxu0 0
        %399 = vmatpush1.bf16.msra.mxu0 0
        %400 = vmatprep.subr.bf16.mxu0 0
        %401 = vmatpush1.bf16.msra.mxu0 0
        %402 = vmatprep.subr.bf16.mxu0 0
        %403 = vmatpush1.bf16.msra.mxu0 0
        %404 = vmatprep.subr.bf16.mxu0 0
        %405 = vmatpush1.bf16.msra.mxu0 0
        %406 = vmatprep.subr.bf16.mxu0 0
        %407 = vmatpush1.bf16.msra.mxu0 0
        %408 = vmatprep.subr.bf16.mxu0 0
        %409 = vmatpush1.bf16.msra.mxu0 0
        %410 = vmatprep.subr.bf16.mxu0 0
        %411 = vmatpush1.bf16.msra.mxu0 0
        %412 = vmatprep.subr.bf16.mxu0 0
        %413 = vmatpush1.bf16.msra.mxu0 0
        %414 = vmatprep.subr.bf16.mxu0 0
        %415 = vmatpush1.bf16.msra.mxu0 0
        %416 = vmatprep.subr.bf16.mxu0 0
        %417 = vmatpush1.bf16.msra.mxu0 0
        %418 = vmatprep.subr.bf16.mxu0 0
        %419 = vmatpush1.bf16.msra.mxu0 0
        %420 = vmatprep.subr.bf16.mxu0 0
        %421 = vmatpush1.bf16.msra.mxu0 0
        %422 = vmatprep.subr.bf16.mxu0 0
        %423 = vmatpush1.bf16.msra.mxu0 0
        %424 = vmatprep.mubr.bf16.mxu0 0
        %425 = vmatmul.mubr.bf16.gmra.mrb[0].mxu0 %v384
        %v426 = vpop.f32.mrb[0].mxu0
        %v427 = vadd.f32 0.0, %v426
        %v428 = vpop.f32.mrb[0].mxu0
        %v429 = vpop.f32.mrb[0].mxu0
        %v430 = vadd.f32 0.0, %v429
        %v431 = vpop.f32.mrb[0].mxu0
        %432 = vmatprep.mubr.bf16.mxu0 0
        %433 = vmatmul.mubr.bf16.gmra.mrb[0].mxu0 %v387
        %v434 = vpop.f32.mrb[0].mxu0
        %v435 = vadd.f32 0.0, %v434
        %v436 = vpop.f32.mrb[0].mxu0
        %v437 = vpop.f32.mrb[0].mxu0
        %v438 = vadd.f32 0.0, %v437
        %v439 = vpop.f32.mrb[0].mxu0
        %440 = vdwg.mxu0
        %v441 = vadd.f32 %v352, %v427
        %v442 = vadd.f32 %v355, %v430
        %v443 = vadd.f32 %v360, %v435
        %v444 = vadd.f32 %v363, %v438
        %v445 = vld [vmem:[%s210] sm:$0xf]
        %v446 = vld [vmem:[%s210 + $0x4] sm:$0x1]
        %v447 = vld [vmem:[%s210 + $0x8] sm:$0xf]
        %v448 = vld [vmem:[%s210 + $0xc] sm:$0x1]
        %v449 = vld [vmem:[%s210 + $0x10] sm:$0xf]
        %v450 = vld [vmem:[%s210 + $0x14] sm:$0x1]
        %v451 = vld [vmem:[%s210 + $0x18] sm:$0xf]
        %v452 = vld [vmem:[%s210 + $0x1c] sm:$0x1]
        %vm453 = vsmask.f32 3328
        %vm454 = vsmask.f32 7440
        %vm455 = vmor %vm453, %vm454
        %v457 = vshrl.u32 %v445, 16
        %v459 = vrot.slane %v457, 4
        %v460 = vshll.u32 %v445, 16
        %v462 = vrot.slane %v460, 5
        %v463 = vor.u32 %v459, %v462
        %v464 = vrot.slane %v463, 4
        %v466 = vshll.u32 %v446, 16
        %v468 = vrot.slane %v466, 5
        %v469 = vsel %vm455, %v464, %v468
        %v471 = vshrl.u32 %v447, 16
        %v473 = vrot.slane %v471, 4
        %v474 = vshll.u32 %v447, 16
        %v476 = vrot.slane %v474, 5
        %v477 = vor.u32 %v473, %v476
        %v478 = vrot.slane %v477, 4
        %v480 = vshll.u32 %v448, 16
        %v482 = vrot.slane %v480, 5
        %v483 = vsel %vm455, %v478, %v482
        %v485 = vshrl.u32 %v449, 16
        %v487 = vrot.slane %v485, 4
        %v488 = vshll.u32 %v449, 16
        %v490 = vrot.slane %v488, 5
        %v491 = vor.u32 %v487, %v490
        %v492 = vrot.slane %v491, 4
        %v494 = vshll.u32 %v450, 16
        %v496 = vrot.slane %v494, 5
        %v497 = vsel %vm455, %v492, %v496
        %v499 = vshrl.u32 %v451, 16
        %v501 = vrot.slane %v499, 4
        %v502 = vshll.u32 %v451, 16
        %v504 = vrot.slane %v502, 5
        %v505 = vor.u32 %v501, %v504
        %v506 = vrot.slane %v505, 4
        %v508 = vshll.u32 %v452, 16
        %v510 = vrot.slane %v508, 5
        %v511 = vsel %vm455, %v506, %v510
        %s512 = scalar_lea.vmem %s2, 12
        %v513 = vld [vmem:[%s512] sm:$0xf]
        %v514 = vunpack.c.l.b16 %v469
        %v515 = vunpack.c.l.b16 %v483
        %v516 = vunpack.c.l.b16 %v497
        %v517 = vunpack.c.l.b16 %v511
        %v518 = vpack.c.b16 %v515, %v514
        %v519 = vpack.c.b16 %v517, %v516
        %v521 = vsel %vm238, %v518, 0
        %v524 = vsel %vm238, %v519, 0
        %v527 = vsel %vm245, %v513, 0
        %529 = vmatprep.subr.bf16.mxu0 0
        %530 = vmatpush1.bf16.msra.mxu0 %v527
        %531 = vmatprep.subr.bf16.mxu0 0
        %532 = vmatpush1.bf16.msra.mxu0 0
        %533 = vmatprep.subr.bf16.mxu0 0
        %534 = vmatpush1.bf16.msra.mxu0 0
        %535 = vmatprep.subr.bf16.mxu0 0
        %536 = vmatpush1.bf16.msra.mxu0 0
        %537 = vmatprep.subr.bf16.mxu0 0
        %538 = vmatpush1.bf16.msra.mxu0 0
        %539 = vmatprep.subr.bf16.mxu0 0
        %540 = vmatpush1.bf16.msra.mxu0 0
        %541 = vmatprep.subr.bf16.mxu0 0
        %542 = vmatpush1.bf16.msra.mxu0 0
        %543 = vmatprep.subr.bf16.mxu0 0
        %544 = vmatpush1.bf16.msra.mxu0 0
        %545 = vmatprep.subr.bf16.mxu0 0
        %546 = vmatpush1.bf16.msra.mxu0 0
        %547 = vmatprep.subr.bf16.mxu0 0
        %548 = vmatpush1.bf16.msra.mxu0 0
        %549 = vmatprep.subr.bf16.mxu0 0
        %550 = vmatpush1.bf16.msra.mxu0 0
        %551 = vmatprep.subr.bf16.mxu0 0
        %552 = vmatpush1.bf16.msra.mxu0 0
        %553 = vmatprep.subr.bf16.mxu0 0
        %554 = vmatpush1.bf16.msra.mxu0 0
        %555 = vmatprep.subr.bf16.mxu0 0
        %556 = vmatpush1.bf16.msra.mxu0 0
        %557 = vmatprep.subr.bf16.mxu0 0
        %558 = vmatpush1.bf16.msra.mxu0 0
        %559 = vmatprep.subr.bf16.mxu0 0
        %560 = vmatpush1.bf16.msra.mxu0 0
        %561 = vmatprep.mubr.bf16.mxu0 0
        %562 = vmatmul.mubr.bf16.gmra.mrb[0].mxu0 %v521
        %v563 = vpop.f32.mrb[0].mxu0
        %v564 = vadd.f32 0.0, %v563
        %v565 = vpop.f32.mrb[0].mxu0
        %v566 = vpop.f32.mrb[0].mxu0
        %v567 = vadd.f32 0.0, %v566
        %v568 = vpop.f32.mrb[0].mxu0
        %569 = vmatprep.mubr.bf16.mxu0 0
        %570 = vmatmul.mubr.bf16.gmra.mrb[0].mxu0 %v524
        %v571 = vpop.f32.mrb[0].mxu0
        %v572 = vadd.f32 0.0, %v571
        %v573 = vpop.f32.mrb[0].mxu0
        %v574 = vpop.f32.mrb[0].mxu0
        %v575 = vadd.f32 0.0, %v574
        %v576 = vpop.f32.mrb[0].mxu0
        %577 = vdwg.mxu0
        %v578 = vadd.f32 %v441, %v564
        %v579 = vadd.f32 %v442, %v567
        %v580 = vadd.f32 %v443, %v572
        %v581 = vadd.f32 %v444, %v575
        %v582 = vld [vmem:[%s215] sm:$0xf]
        %v583 = vld [vmem:[%s215 + $0x4] sm:$0x1]
        %v584 = vld [vmem:[%s215 + $0x8] sm:$0xf]
        %v585 = vld [vmem:[%s215 + $0xc] sm:$0x1]
        %v586 = vld [vmem:[%s215 + $0x10] sm:$0xf]
        %v587 = vld [vmem:[%s215 + $0x14] sm:$0x1]
        %v588 = vld [vmem:[%s215 + $0x18] sm:$0xf]
        %v589 = vld [vmem:[%s215 + $0x1c] sm:$0x1]
        %v591 = vshrl.u32 %v582, 16
        %v593 = vrot.slane %v591, 4
        %v594 = vshll.u32 %v582, 16
        %v596 = vrot.slane %v594, 5
        %v597 = vor.u32 %v593, %v596
        %v598 = vrot.slane %v597, 4
        %v600 = vshll.u32 %v583, 16
        %v602 = vrot.slane %v600, 5
        %v603 = vsel %vm455, %v598, %v602
        %v605 = vshrl.u32 %v584, 16
        %v607 = vrot.slane %v605, 4
        %v608 = vshll.u32 %v584, 16
        %v610 = vrot.slane %v608, 5
        %v611 = vor.u32 %v607, %v610
        %v612 = vrot.slane %v611, 4
        %v614 = vshll.u32 %v585, 16
        %v616 = vrot.slane %v614, 5
        %v617 = vsel %vm455, %v612, %v616
        %v619 = vshrl.u32 %v586, 16
        %v621 = vrot.slane %v619, 4
        %v622 = vshll.u32 %v586, 16
        %v624 = vrot.slane %v622, 5
        %v625 = vor.u32 %v621, %v624
        %v626 = vrot.slane %v625, 4
        %v628 = vshll.u32 %v587, 16
        %v630 = vrot.slane %v628, 5
        %v631 = vsel %vm455, %v626, %v630
        %v633 = vshrl.u32 %v588, 16
        %v635 = vrot.slane %v633, 4
        %v636 = vshll.u32 %v588, 16
        %v638 = vrot.slane %v636, 5
        %v639 = vor.u32 %v635, %v638
        %v640 = vrot.slane %v639, 4
        %v642 = vshll.u32 %v589, 16
        %v644 = vrot.slane %v642, 5
        %v645 = vsel %vm455, %v640, %v644
        %s646 = scalar_lea.vmem %s2, 16
        %v647 = vld [vmem:[%s646] sm:$0xf]
        %v648 = vunpack.c.l.b16 %v603
        %v649 = vunpack.c.l.b16 %v617
        %v650 = vunpack.c.l.b16 %v631
        %v651 = vunpack.c.l.b16 %v645
        %v652 = vpack.c.b16 %v649, %v648
        %v653 = vpack.c.b16 %v651, %v650
        %v655 = vsel %vm238, %v652, 0
        %v658 = vsel %vm238, %v653, 0
        %v661 = vsel %vm245, %v647, 0
        %663 = vmatprep.subr.bf16.mxu0 0
        %664 = vmatpush1.bf16.msra.mxu0 %v661
        %665 = vmatprep.subr.bf16.mxu0 0
        %666 = vmatpush1.bf16.msra.mxu0 0
        %667 = vmatprep.subr.bf16.mxu0 0
        %668 = vmatpush1.bf16.msra.mxu0 0
        %669 = vmatprep.subr.bf16.mxu0 0
        %670 = vmatpush1.bf16.msra.mxu0 0
        %671 = vmatprep.subr.bf16.mxu0 0
        %672 = vmatpush1.bf16.msra.mxu0 0
        %673 = vmatprep.subr.bf16.mxu0 0
        %674 = vmatpush1.bf16.msra.mxu0 0
        %675 = vmatprep.subr.bf16.mxu0 0
        %676 = vmatpush1.bf16.msra.mxu0 0
        %677 = vmatprep.subr.bf16.mxu0 0
        %678 = vmatpush1.bf16.msra.mxu0 0
        %679 = vmatprep.subr.bf16.mxu0 0
        %680 = vmatpush1.bf16.msra.mxu0 0
        %681 = vmatprep.subr.bf16.mxu0 0
        %682 = vmatpush1.bf16.msra.mxu0 0
        %683 = vmatprep.subr.bf16.mxu0 0
        %684 = vmatpush1.bf16.msra.mxu0 0
        %685 = vmatprep.subr.bf16.mxu0 0
        %686 = vmatpush1.bf16.msra.mxu0 0
        %687 = vmatprep.subr.bf16.mxu0 0
        %688 = vmatpush1.bf16.msra.mxu0 0
        %689 = vmatprep.subr.bf16.mxu0 0
        %690 = vmatpush1.bf16.msra.mxu0 0
        %691 = vmatprep.subr.bf16.mxu0 0
        %692 = vmatpush1.bf16.msra.mxu0 0
        %693 = vmatprep.subr.bf16.mxu0 0
        %694 = vmatpush1.bf16.msra.mxu0 0
        %695 = vmatprep.mubr.bf16.mxu0 0
        %696 = vmatmul.mubr.bf16.gmra.mrb[0].mxu0 %v655
        %v697 = vpop.f32.mrb[0].mxu0
        %v698 = vadd.f32 0.0, %v697
        %v699 = vpop.f32.mrb[0].mxu0
        %v700 = vpop.f32.mrb[0].mxu0
        %v701 = vadd.f32 0.0, %v700
        %v702 = vpop.f32.mrb[0].mxu0
        %703 = vmatprep.mubr.bf16.mxu0 0
        %704 = vmatmul.mubr.bf16.gmra.mrb[0].mxu0 %v658
        %v705 = vpop.f32.mrb[0].mxu0
        %v706 = vadd.f32 0.0, %v705
        %v707 = vpop.f32.mrb[0].mxu0
        %v708 = vpop.f32.mrb[0].mxu0
        %v709 = vadd.f32 0.0, %v708
        %v710 = vpop.f32.mrb[0].mxu0
        %711 = vdwg.mxu0
        %v712 = vadd.f32 %v578, %v698
        %v713 = vadd.f32 %v579, %v701
        %v714 = vadd.f32 %v580, %v706
        %v715 = vadd.f32 %v581, %v709
        %v716 = vld [vmem:[%s366] sm:$0xf]
        %v717 = vld [vmem:[%s366 + $0x4] sm:$0x1]
        %v718 = vld [vmem:[%s366 + $0x8] sm:$0xf]
        %v719 = vld [vmem:[%s366 + $0xc] sm:$0x1]
        %v720 = vld [vmem:[%s366 + $0x10] sm:$0xf]
        %v721 = vld [vmem:[%s366 + $0x14] sm:$0x1]
        %v722 = vld [vmem:[%s366 + $0x18] sm:$0xf]
        %v723 = vld [vmem:[%s366 + $0x1c] sm:$0x1]
        %v725 = vshrl.u32 %v716, 16
        %v727 = vrot.slane %v725, 4
        %v728 = vshll.u32 %v716, 16
        %v730 = vrot.slane %v728, 5
        %v731 = vor.u32 %v727, %v730
        %v732 = vrot.slane %v731, 4
        %v734 = vshll.u32 %v717, 16
        %v736 = vrot.slane %v734, 5
        %v737 = vsel %vm455, %v732, %v736
        %v739 = vshrl.u32 %v718, 16
        %v741 = vrot.slane %v739, 4
        %v742 = vshll.u32 %v718, 16
        %v744 = vrot.slane %v742, 5
        %v745 = vor.u32 %v741, %v744
        %v746 = vrot.slane %v745, 4
        %v748 = vshll.u32 %v719, 16
        %v750 = vrot.slane %v748, 5
        %v751 = vsel %vm455, %v746, %v750
        %v753 = vshrl.u32 %v720, 16
        %v755 = vrot.slane %v753, 4
        %v756 = vshll.u32 %v720, 16
        %v758 = vrot.slane %v756, 5
        %v759 = vor.u32 %v755, %v758
        %v760 = vrot.slane %v759, 4
        %v762 = vshll.u32 %v721, 16
        %v764 = vrot.slane %v762, 5
        %v765 = vsel %vm455, %v760, %v764
        %v767 = vshrl.u32 %v722, 16
        %v769 = vrot.slane %v767, 4
        %v770 = vshll.u32 %v722, 16
        %v772 = vrot.slane %v770, 5
        %v773 = vor.u32 %v769, %v772
        %v774 = vrot.slane %v773, 4
        %v776 = vshll.u32 %v723, 16
        %v778 = vrot.slane %v776, 5
        %v779 = vsel %vm455, %v774, %v778
        %s780 = scalar_lea.vmem %s2, 20
        %v781 = vld [vmem:[%s780] sm:$0xf]
        %v782 = vunpack.c.l.b16 %v737
        %v783 = vunpack.c.l.b16 %v751
        %v784 = vunpack.c.l.b16 %v765
        %v785 = vunpack.c.l.b16 %v779
        %v786 = vpack.c.b16 %v783, %v782
        %v787 = vpack.c.b16 %v785, %v784
        %v789 = vsel %vm238, %v786, 0
        %v792 = vsel %vm238, %v787, 0
        %v795 = vsel %vm245, %v781, 0
        %797 = vmatprep.subr.bf16.mxu0 0
        %798 = vmatpush1.bf16.msra.mxu0 %v795
        %799 = vmatprep.subr.bf16.mxu0 0
        %800 = vmatpush1.bf16.msra.mxu0 0
        %801 = vmatprep.subr.bf16.mxu0 0
        %802 = vmatpush1.bf16.msra.mxu0 0
        %803 = vmatprep.subr.bf16.mxu0 0
        %804 = vmatpush1.bf16.msra.mxu0 0
        %805 = vmatprep.subr.bf16.mxu0 0
        %806 = vmatpush1.bf16.msra.mxu0 0
        %807 = vmatprep.subr.bf16.mxu0 0
        %808 = vmatpush1.bf16.msra.mxu0 0
        %809 = vmatprep.subr.bf16.mxu0 0
        %810 = vmatpush1.bf16.msra.mxu0 0
        %811 = vmatprep.subr.bf16.mxu0 0
        %812 = vmatpush1.bf16.msra.mxu0 0
        %813 = vmatprep.subr.bf16.mxu0 0
        %814 = vmatpush1.bf16.msra.mxu0 0
        %815 = vmatprep.subr.bf16.mxu0 0
        %816 = vmatpush1.bf16.msra.mxu0 0
        %817 = vmatprep.subr.bf16.mxu0 0
        %818 = vmatpush1.bf16.msra.mxu0 0
        %819 = vmatprep.subr.bf16.mxu0 0
        %820 = vmatpush1.bf16.msra.mxu0 0
        %821 = vmatprep.subr.bf16.mxu0 0
        %822 = vmatpush1.bf16.msra.mxu0 0
        %823 = vmatprep.subr.bf16.mxu0 0
        %824 = vmatpush1.bf16.msra.mxu0 0
        %825 = vmatprep.subr.bf16.mxu0 0
        %826 = vmatpush1.bf16.msra.mxu0 0
        %827 = vmatprep.subr.bf16.mxu0 0
        %828 = vmatpush1.bf16.msra.mxu0 0
        %829 = vmatprep.mubr.bf16.mxu0 0
        %830 = vmatmul.mubr.bf16.gmra.mrb[0].mxu0 %v789
        %v831 = vpop.f32.mrb[0].mxu0
        %v832 = vadd.f32 0.0, %v831
        %v833 = vpop.f32.mrb[0].mxu0
        %v834 = vpop.f32.mrb[0].mxu0
        %v835 = vadd.f32 0.0, %v834
        %v836 = vpop.f32.mrb[0].mxu0
        %837 = vmatprep.mubr.bf16.mxu0 0
        %838 = vmatmul.mubr.bf16.gmra.mrb[0].mxu0 %v792
        %v839 = vpop.f32.mrb[0].mxu0
        %v840 = vadd.f32 0.0, %v839
        %v841 = vpop.f32.mrb[0].mxu0
        %v842 = vpop.f32.mrb[0].mxu0
        %v843 = vadd.f32 0.0, %v842
        %v844 = vpop.f32.mrb[0].mxu0
        %845 = vdwg.mxu0
        %v846 = vadd.f32 %v712, %v832
        %v847 = vadd.f32 %v713, %v835
        %v848 = vadd.f32 %v714, %v840
        %v849 = vadd.f32 %v715, %v843
        %v850 = vld [vmem:[%s3] sm:$0xff]
        %v851 = vlaneseq
        %v852 = vshrl.u32 %v851, 7
        %v853 = vsub.s32 0, %v852
        %v854 = vrot.slane %v850, %v853
        %v855 = vadd.f32 %v846, %v854
        %v856 = vadd.f32 %v847, %v854
        %v857 = vadd.f32 %v848, %v854
        %v858 = vadd.f32 %v849, %v854
        %859 = vadd.xlane.f32.xlu0 %v855
        %v860 = vpop.xlane.xlu0 %859
        %861 = vadd.xlane.f32.xlu0 %v856
        %v862 = vpop.xlane.xlu0 %861
        %863 = vadd.xlane.f32.xlu0 %v857
        %v864 = vpop.xlane.xlu0 %863
        %865 = vadd.xlane.f32.xlu0 %v858
        %v866 = vpop.xlane.xlu0 %865
        %v867 = vmul.f32 %v860, 0.125
        %v868 = vmul.f32 %v862, 0.125
        %v869 = vmul.f32 %v864, 0.125
        %v870 = vmul.f32 %v866, 0.125
        %v871 = vsub.f32 %v855, %v867
        %v872 = vsub.f32 %v856, %v868
        %v873 = vsub.f32 %v857, %v869
        %v874 = vsub.f32 %v858, %v870
        %v875 = vlaneseq
        %v876 = vshrl.u32 %v875, 7
        %v877 = vsub.s32 3, %v876
        %v878 = vrot.slane %v850, %v877
        %v879 = vmul.f32 %v871, %v878
        %v880 = vmul.f32 %v872, %v878
        %v881 = vmul.f32 %v873, %v878
        %v882 = vmul.f32 %v874, %v878
        %v883 = vmul.f32 %v879, %v879
        %v884 = vmul.f32 %v880, %v880
        %v885 = vmul.f32 %v881, %v881
        %v886 = vmul.f32 %v882, %v882
        %887 = vadd.xlane.f32.xlu0 %v883
        %v888 = vpop.xlane.xlu0 %887
        %889 = vadd.xlane.f32.xlu0 %v884
        %v890 = vpop.xlane.xlu0 %889
        %891 = vadd.xlane.f32.xlu0 %v885
        %v892 = vpop.xlane.xlu0 %891
        %893 = vadd.xlane.f32.xlu0 %v886
        %v894 = vpop.xlane.xlu0 %893
        %v895 = vmul.f32 %v888, 0.125
        %v896 = vmul.f32 %v890, 0.125
        %v897 = vmul.f32 %v892, 0.125
        %v898 = vmul.f32 %v894, 0.125
        %v899 = vadd.f32 %v895, 1e-05
        %v900 = vadd.f32 %v896, 1e-05
        %v901 = vadd.f32 %v897, 1e-05
        %v902 = vadd.f32 %v898, 1e-05
        %v903 = vrsqrt.pop %v899
        %v904 = vrsqrt.pop %v900
        %v905 = vrsqrt.pop %v901
        %v906 = vrsqrt.pop %v902
        %v907 = vmul.f32 %v879, %v903
        %v908 = vmul.f32 %v880, %v904
        %v909 = vmul.f32 %v881, %v905
        %v910 = vmul.f32 %v882, %v906
        %v911 = vlaneseq
        %v912 = vshrl.u32 %v911, 7
        %v913 = vsub.s32 1, %v912
        %v914 = vrot.slane %v850, %v913
        %v915 = vmul.f32 %v907, %v914
        %v916 = vmul.f32 %v908, %v914
        %v917 = vmul.f32 %v909, %v914
        %v918 = vmul.f32 %v910, %v914
        %v919 = vlaneseq
        %v920 = vshrl.u32 %v919, 7
        %v921 = vsub.s32 2, %v920
        %v922 = vrot.slane %v850, %v921
        %v923 = vadd.f32 %v915, %v922
        %v924 = vadd.f32 %v916, %v922
        %v925 = vadd.f32 %v917, %v922
        %v926 = vadd.f32 %v918, %v922
        %927 = vst [vmem:[%s205] sm:$0xff] %v923
        %928 = vst [vmem:[%s205 + $0x8] sm:$0xff] %v924
        %929 = vst [vmem:[%s205 + $0x10] sm:$0xff] %v925
        %930 = vst [vmem:[%s205 + $0x18] sm:$0xff] %v926
        %s931 = sand.u32 %s120, 1
        %s932 = scalar_lea.sflag [#allocation3], %s931
        %s933 = sand.u32 %s120, 1
        %s934 = smul.addr %s933, 32
        %s935 = scalar_lea.vmem [#allocation2], %s934
        // Predicated region
        $region37: #{tpu_custom_call.1} parent=35 // pred_check
          %p936 = pneg %p130
        $region38: #{tpu_custom_call.1} parent=35 // pred_check_branch
          %938 = sbr.rel (%p936) target = $region40
        $region39: #{tpu_custom_call.1} parent=35 // pred_region
          %s940 = ssub.s32 512, 512
          %941 = vsyncadd %s932, %s940
          %s942 = smul.addr %s18, 4
          %s943 = smul.addr %s942, 128
          %s944 = scalar_lea.hbm %s4, %s943
          %s945 = sshll.u32 %s935, 4
          %s946 = int_to_ptr.vmem [resolvable:$true] %s945
          %951 = dma.vmem_to_hbm [thread:$0]  %s946, 512, %s944, %s932, 128, 128, 8
        $region40: #{tpu_custom_call.1} parent=35 // pred_fallthru
          _
      $region36: #{tpu_custom_call.1} parent=5 // pred_fallthru
        _
      %p952 = scmp.le.s32.totalorder 2, %s13
      // Predicated region
      $region41: #{tpu_custom_call.1} parent=5 // pred_check
        %p953 = pneg %p952
      $region42: #{tpu_custom_call.1} parent=5 // pred_check_branch
        %955 = sbr.rel (%p953) target = $region44
      $region43: #{tpu_custom_call.1} parent=5 // pred_region
        %s956 = ssub.s32 %s13, 2
        // Predicated region
        $region45: #{tpu_custom_call.1} parent=43 // pred_check
          %p957 = pneg %p136
        $region46: #{tpu_custom_call.1} parent=43 // pred_check_branch
          %959 = sbr.rel (%p957) target = $region48
        $region47: #{tpu_custom_call.1} parent=43 // pred_region
          %s960 = sand.u32 %s121, 1
          %s961 = scalar_lea.sflag [#allocation3], %s960
          %s962 = sand.u32 %s121, 1
          %s963 = smul.addr %s962, 32
          %s964 = scalar_lea.vmem [#allocation2], %s963
          %965 = dma.done %s961, 512
        $region48: #{tpu_custom_call.1} parent=43 // pred_fallthru
          _
      $region44: #{tpu_custom_call.1} parent=5 // pred_fallthru
        _
    $region6: #{tpu_custom_call.1} parent=1 // loop_footer
      %s17 = sadd.s32 1, %s13
    $region7: #{tpu_custom_call.1} parent=1 // loop_footer_branch
      %12 = sbr.rel target = $region3
    $region8: #{tpu_custom_call.1} parent=1 // loop_exit
      _
    %966 = vsyncpa [#allocation3], 1
    %s967 = scalar_lea.sflag [#allocation3], 1
    %968 = vsyncpa %s967, 1

</llo_original>
